<compile_context>
chip_gen: v6e
topology: v6e:2x2x1
jax: 0.10.0
libtpu: 0.0.40
codegen_flags: <defaults>
</compile_context>

<pallas_src>
import numpy as np
import jax
import jax.numpy as jnp
from jax.experimental import pallas as pl
from jax.experimental.pallas import tpu as pltpu


# ----------------------------------------------------------------------------
# MADE degree / mask construction (deterministic, sequential order & mode)
# ----------------------------------------------------------------------------
def create_degrees(n_inputs, n_hiddens):
    degrees = [np.arange(1, n_inputs + 1)]          # input_order == 'sequential'
    for n_h in n_hiddens:                            # mode == 'sequential'
        deg_l = np.arange(n_h) % max(1, n_inputs - 1) + min(1, n_inputs - 1)
        degrees.append(deg_l)
    return degrees


def create_masks(degrees):
    Ms = []
    for d0, d1 in zip(degrees[:-1], degrees[1:]):
        Ms.append((d0[:, None] <= d1[None, :]).astype(np.float32))
    Mmp = (degrees[-1][:, None] < degrees[0][None, :]).astype(np.float32)
    return Ms, Mmp


def create_weights(key, n_inputs, n_hiddens):
    """Deterministic stand-in for the module's random init (same shapes)."""
    n_units = [n_inputs] + list(n_hiddens)
    Ws, bs = [], []
    for n0, n1 in zip(n_units[:-1], n_units[1:]):
        key, k = jax.random.split(key)
        Ws.append(jax.random.normal(k, (n0, n1), jnp.float32) / np.sqrt(n0 + 1))
        bs.append(jnp.zeros((1, n1), jnp.float32))
    key, km, kp = jax.random.split(key, 3)
    Wm = jax.random.normal(km, (n_units[-1], n_inputs), jnp.float32) / np.sqrt(n_units[-1] + 1)
    Wp = jax.random.normal(kp, (n_units[-1], n_inputs), jnp.float32) / np.sqrt(n_units[-1] + 1)
    bm = jnp.zeros((1, n_inputs), jnp.float32)
    bp = jnp.zeros((1, n_inputs), jnp.float32)
    return Ws, bs, Wm, bm, Wp, bp


def prepare_params(Ms, Ws, bs, Mmp, Wm, bm, Wp, bp, *, param_dtype=jnp.bfloat16):
    """Fold static masks into weights, TRANSPOSE them, and fuse the m/logp head.

    Done once at parameter-prep time; the kernel only sees pre-masked,
    transposed bf16 weights and f32 column biases.
    """
    Wts = [(M * W).T.astype(param_dtype) for M, W in zip(Ms, Ws)]        # (n_out, n_in_l)
    bts = [b.reshape(-1, 1).astype(jnp.float32) for b in bs]             # (n_out, 1)
    W_head_t = jnp.concatenate([(Mmp * Wm).T, (Mmp * Wp).T],
                               axis=0).astype(param_dtype)               # (2*n_in, H)
    b_head_t = jnp.concatenate([bm, bp], axis=1).reshape(-1, 1).astype(jnp.float32)
    return Wts, bts, W_head_t, b_head_t


# ----------------------------------------------------------------------------
# Pallas kernel (transposed layout: batch on the lane axis)
# ----------------------------------------------------------------------------
def make_made_kernel(n_layers, n_inputs):
    log2pi_const = float(n_inputs * np.log(2.0 * np.pi))

    def kernel(x_ref, *rest):
        # rest = Wt_1, bt_1, ..., Wt_L, bt_L, W_head_t, b_head_t, out_ref
        out_ref = rest[-1]
        wrefs = rest[:-1]

        xT = x_ref[...]                              # (n_in, tb) f32, lane-dense
        h = xT.astype(wrefs[0].dtype)                # bf16 for the MXU

        idx = 0
        for _ in range(n_layers):
            Wt = wrefs[idx][...]                     # pre-masked bf16 (n_out, n_prev)
            bt = wrefs[idx + 1][...]                 # f32 (n_out, 1)
            idx += 2
            z = jnp.dot(Wt, h, preferred_element_type=jnp.float32) + bt
            h = jnp.maximum(z, 0.0).astype(Wt.dtype)  # ReLU in f32, back to bf16

        W_head = wrefs[idx][...]                     # (2*n_in, H) bf16, pre-masked
        b_head = wrefs[idx + 1][...]                 # (2*n_in, 1) f32
        z = jnp.dot(W_head, h, preferred_element_type=jnp.float32) + b_head
        m = z[:n_inputs, :]                          # sublane slice (8-aligned)
        logp = z[n_inputs:, :]

        u = jnp.exp(0.5 * logp) * (xT - m)           # (n_in, tb) lane-dense
        out_ref[:n_inputs, :] = u

        diff = jnp.sum(u * u - logp, axis=0, keepdims=True)   # (1, tb)
        out_ref[n_inputs:, :] = -0.5 * (log2pi_const + diff)

    return kernel


def _round_up(x, m):
    return (x + m - 1) // m * m


def gaussian_made_forward(x, Wts, bts, W_head_t, b_head_t, n_inputs, *,
                          block_batch=2048):
    """Returns (u, log_likelihood), matching GaussianMADE.forward / .log_likelihood."""
    n_layers = len(Wts)
    batch = x.shape[0]
    LANE = 128

    # Batch tile on the lane axis: multiple of 128 (also a multiple of 16 for
    # bf16 packing).  Cap so the grid has >= 2 blocks when there is enough
    # work, so v7x's two TensorCores both get batch tiles.
    padded0 = _round_up(batch, LANE)
    tb = min(_round_up(block_batch, LANE), padded0)
    n_blocks = pl.cdiv(padded0, tb)
    if n_blocks < 2 and padded0 > LANE:
        tb = _round_up(pl.cdiv(padded0, 2), LANE)
        n_blocks = pl.cdiv(padded0, tb)
    padded = n_blocks * tb

    xT = jnp.pad(x.T, ((0, 0), (0, padded - batch)))        # (n_in, padded)

    flat_inputs = [xT]
    for Wt, bt in zip(Wts, bts):
        flat_inputs += [Wt, bt]
    flat_inputs += [W_head_t, b_head_t]

    # x / output tiled over the batch (lane) grid; weights full-extent and
    # resident (same block index every grid step -> no per-step re-DMA).
    in_specs = [pl.BlockSpec((n_inputs, tb), lambda i: (0, i))]
    for arr in flat_inputs[1:]:
        in_specs.append(pl.BlockSpec(arr.shape, lambda i: (0, 0)))
    # Single packed, lane-dense output slab: rows [0:n_in] = u^T, row n_in = ll.
    out_specs = pl.BlockSpec((n_inputs + 1, tb), lambda i: (0, i))

    # Advisory cost estimate so XLA can schedule around the call.
    flops = 0
    for W in Wts + [W_head_t]:
        flops += 2 * padded * int(W.shape[0]) * int(W.shape[1])
    bytes_accessed = sum(int(np.prod(a.shape)) * a.dtype.itemsize for a in flat_inputs)
    bytes_accessed += padded * (n_inputs + 1) * 4
    cost = pl.CostEstimate(flops=int(flops),
                           transcendentals=int(padded * n_inputs),
                           bytes_accessed=int(bytes_accessed))

    kernel = make_made_kernel(n_layers, n_inputs)
    out = pl.pallas_call(
        kernel,
        out_shape=jax.ShapeDtypeStruct((n_inputs + 1, padded), jnp.float32),
        grid_spec=pltpu.PrefetchScalarGridSpec(
            num_scalar_prefetch=0,
            grid=(n_blocks,),
            in_specs=in_specs,
            out_specs=out_specs,
        ),
        compiler_params=pltpu.CompilerParams(
            # Batch tiles are independent: shard across both TCs on v7x.
            dimension_semantics=("parallel",),
        ),
        cost_estimate=cost,
    )(*flat_inputs)

    u = out[:n_inputs, :batch].T                 # (batch, n_inputs)
    ll = out[n_inputs, :batch]                   # (batch,)
    return u, ll


# ----------------------------------------------------------------------------
# Pure-JAX reference (mirrors the kernel's dtype path: bf16 matmuls, f32 acc)
# ----------------------------------------------------------------------------
def reference_forward(x, Wts, bts, W_head_t, b_head_t, n_inputs):
    xT = x.T
    h = xT.astype(Wts[0].dtype)
    for Wt, bt in zip(Wts, bts):
        z = jnp.dot(Wt, h, preferred_element_type=jnp.float32) + bt
        h = jnp.maximum(z, 0.0).astype(Wt.dtype)
    z = jnp.dot(W_head_t, h, preferred_element_type=jnp.float32) + b_head_t
    m, logp = z[:n_inputs, :], z[n_inputs:, :]
    u = jnp.exp(0.5 * logp) * (xT - m)
    diff = jnp.sum(u * u - logp, axis=0)
    const = float(n_inputs * np.log(2.0 * np.pi))
    return u.T, -0.5 * (const + diff)


# ----------------------------------------------------------------------------
if __name__ == "__main__":
    n_inputs = 8
    n_hiddens = [32, 32]
    batch = 300   # not a multiple of the tile -> exercises padding + a 2-block grid

    # Static structural masks from degrees.
    degrees = create_degrees(n_inputs, n_hiddens)
    Ms_np, Mmp_np = create_masks(degrees)
    Ms = [jnp.asarray(M) for M in Ms_np]
    Mmp = jnp.asarray(Mmp_np)

    key = jax.random.PRNGKey(0)
    key, kw, kx = jax.random.split(key, 3)
    Ws, bs, Wm, bm, Wp, bp = create_weights(kw, n_inputs, n_hiddens)

    # Fold masks / transpose / fuse head / cast to bf16 ONCE, offline.
    Wts, bts, W_head_t, b_head_t = prepare_params(Ms, Ws, bs, Mmp, Wm, bm, Wp, bp)

    x = jax.random.normal(kx, (batch, n_inputs), jnp.float32)

    u, ll = gaussian_made_forward(x, Wts, bts, W_head_t, b_head_t, n_inputs)
    u = jax.block_until_ready(u)
    ll = jax.block_until_ready(ll)

    u_ref, ll_ref = reference_forward(x, Wts, bts, W_head_t, b_head_t, n_inputs)
    np.testing.assert_allclose(np.asarray(u), np.asarray(u_ref), rtol=1e-3, atol=1e-3)
    np.testing.assert_allclose(np.asarray(ll), np.asarray(ll_ref), rtol=1e-3, atol=1e-3)

    print("KERNEL_OK")
</pallas_src>

<mosaic_0001>
module attributes {stable_mosaic.version = 11 : i64} {
  func.func @kernel(%arg0: i32, %arg1: memref<8x256xf32, #tpu.memory_space<vmem>>, %arg2: memref<32x8xbf16, #tpu.memory_space<vmem>>, %arg3: memref<32x1xf32, #tpu.memory_space<vmem>>, %arg4: memref<32x32xbf16, #tpu.memory_space<vmem>>, %arg5: memref<32x1xf32, #tpu.memory_space<vmem>>, %arg6: memref<16x32xbf16, #tpu.memory_space<vmem>>, %arg7: memref<16x1xf32, #tpu.memory_space<vmem>>, %arg8: memref<9x256xf32, #tpu.memory_space<vmem>>) attributes {dimension_semantics = [#tpu.dimension_semantics<parallel>], iteration_bounds = array<i64: 2>, scalar_prefetch = 0 : i64, scratch_operands = 0 : i64, tpu.core_type = #tpu.core_type<tc>, window_params = [{transform_indices = @transform_0, window_bounds = array<i64: 8, 256>}, {pipeline_mode = #tpu.pipeline_mode<synchronous>, transform_indices = @transform_1, window_bounds = array<i64: 32, 8>}, {pipeline_mode = #tpu.pipeline_mode<synchronous>, transform_indices = @transform_2, window_bounds = array<i64: 32, 1>}, {pipeline_mode = #tpu.pipeline_mode<synchronous>, transform_indices = @transform_3, window_bounds = array<i64: 32, 32>}, {pipeline_mode = #tpu.pipeline_mode<synchronous>, transform_indices = @transform_4, window_bounds = array<i64: 32, 1>}, {pipeline_mode = #tpu.pipeline_mode<synchronous>, transform_indices = @transform_5, window_bounds = array<i64: 16, 32>}, {pipeline_mode = #tpu.pipeline_mode<synchronous>, transform_indices = @transform_6, window_bounds = array<i64: 16, 1>}, {transform_indices = @transform_7, window_bounds = array<i64: 9, 256>}]} {
    %c0 = arith.constant 0 : index
    %c0_0 = arith.constant 0 : index
    %0 = vector.load %arg1[%c0, %c0_0] : memref<8x256xf32, #tpu.memory_space<vmem>>, vector<8x256xf32>
    %1 = arith.truncf %0 : vector<8x256xf32> to vector<8x256xbf16>
    %c0_1 = arith.constant 0 : index
    %c0_2 = arith.constant 0 : index
    %2 = vector.load %arg2[%c0_1, %c0_2] : memref<32x8xbf16, #tpu.memory_space<vmem>>, vector<32x8xbf16>
    %c0_3 = arith.constant 0 : index
    %c0_4 = arith.constant 0 : index
    %3 = vector.load %arg3[%c0_3, %c0_4] : memref<32x1xf32, #tpu.memory_space<vmem>>, vector<32x1xf32>
    %cst = arith.constant dense<0.000000e+00> : vector<32x256xf32>
    %4 = tpu.matmul %2, %1, %cst {dimension_numbers = #tpu.dot_dimension_numbers<[1], [0], [0], [1], [0, 0, 1, 1], [], []>} : vector<32x8xbf16>, vector<8x256xbf16>, vector<32x256xf32> -> vector<32x256xf32>
    %5 = vector.broadcast %3 : vector<32x1xf32> to vector<32x256xf32>
    %6 = arith.addf %4, %5 : vector<32x256xf32>
    %cst_5 = arith.constant 0.000000e+00 : f32
    %7 = vector.broadcast %cst_5 : f32 to vector<32x256xf32>
    %8 = arith.maximumf %6, %7 : vector<32x256xf32>
    %9 = arith.truncf %8 : vector<32x256xf32> to vector<32x256xbf16>
    %c0_6 = arith.constant 0 : index
    %c0_7 = arith.constant 0 : index
    %10 = vector.load %arg4[%c0_6, %c0_7] : memref<32x32xbf16, #tpu.memory_space<vmem>>, vector<32x32xbf16>
    %c0_8 = arith.constant 0 : index
    %c0_9 = arith.constant 0 : index
    %11 = vector.load %arg5[%c0_8, %c0_9] : memref<32x1xf32, #tpu.memory_space<vmem>>, vector<32x1xf32>
    %cst_10 = arith.constant dense<0.000000e+00> : vector<32x256xf32>
    %12 = tpu.matmul %10, %9, %cst_10 {dimension_numbers = #tpu.dot_dimension_numbers<[1], [0], [0], [1], [0, 0, 1, 1], [], []>} : vector<32x32xbf16>, vector<32x256xbf16>, vector<32x256xf32> -> vector<32x256xf32>
    %13 = vector.broadcast %11 : vector<32x1xf32> to vector<32x256xf32>
    %14 = arith.addf %12, %13 : vector<32x256xf32>
    %cst_11 = arith.constant 0.000000e+00 : f32
    %15 = vector.broadcast %cst_11 : f32 to vector<32x256xf32>
    %16 = arith.maximumf %14, %15 : vector<32x256xf32>
    %17 = arith.truncf %16 : vector<32x256xf32> to vector<32x256xbf16>
    %c0_12 = arith.constant 0 : index
    %c0_13 = arith.constant 0 : index
    %18 = vector.load %arg6[%c0_12, %c0_13] : memref<16x32xbf16, #tpu.memory_space<vmem>>, vector<16x32xbf16>
    %c0_14 = arith.constant 0 : index
    %c0_15 = arith.constant 0 : index
    %19 = vector.load %arg7[%c0_14, %c0_15] : memref<16x1xf32, #tpu.memory_space<vmem>>, vector<16x1xf32>
    %cst_16 = arith.constant dense<0.000000e+00> : vector<16x256xf32>
    %20 = tpu.matmul %18, %17, %cst_16 {dimension_numbers = #tpu.dot_dimension_numbers<[1], [0], [0], [1], [0, 0, 1, 1], [], []>} : vector<16x32xbf16>, vector<32x256xbf16>, vector<16x256xf32> -> vector<16x256xf32>
    %21 = vector.broadcast %19 : vector<16x1xf32> to vector<16x256xf32>
    %22 = arith.addf %20, %21 : vector<16x256xf32>
    %23 = vector.extract_strided_slice %22 {offsets = [0, 0], sizes = [8, 256], strides = [1, 1]} : vector<16x256xf32> to vector<8x256xf32>
    %24 = vector.extract_strided_slice %22 {offsets = [8, 0], sizes = [8, 256], strides = [1, 1]} : vector<16x256xf32> to vector<8x256xf32>
    %cst_17 = arith.constant 5.000000e-01 : f32
    %25 = vector.broadcast %cst_17 : f32 to vector<8x256xf32>
    %26 = arith.mulf %25, %24 : vector<8x256xf32>
    %27 = math.exp %26 : vector<8x256xf32>
    %28 = arith.subf %0, %23 : vector<8x256xf32>
    %29 = arith.mulf %27, %28 : vector<8x256xf32>
    %c0_18 = arith.constant 0 : index
    %c0_19 = arith.constant 0 : index
    %30 = vector.load %arg8[%c0_18, %c0_19] : memref<9x256xf32, #tpu.memory_space<vmem>>, vector<8x256xf32>
    tpu.vector_store %arg8[%c0_18, %c0_19], %29 {strides = array<i32>} : memref<9x256xf32, #tpu.memory_space<vmem>>, vector<8x256xf32>,
    %31 = arith.mulf %29, %29 : vector<8x256xf32>
    %32 = arith.subf %31, %24 : vector<8x256xf32>
    %cst_20 = arith.constant dense<0.000000e+00> : vector<256xf32>
    %33 = vector.multi_reduction <add>, %32, %cst_20 [0] : vector<8x256xf32> to vector<256xf32>
    %34 = vector.shape_cast %33 : vector<256xf32> to vector<1x256xf32>
    %cst_21 = arith.constant 14.7030163 : f32
    %35 = vector.broadcast %cst_21 : f32 to vector<1x256xf32>
    %36 = arith.addf %35, %34 : vector<1x256xf32>
    %cst_22 = arith.constant -5.000000e-01 : f32
    %37 = vector.broadcast %cst_22 : f32 to vector<1x256xf32>
    %38 = arith.mulf %37, %36 : vector<1x256xf32>
    %c8 = arith.constant 8 : index
    %c0_23 = arith.constant 0 : index
    %39 = vector.load %arg8[%c8, %c0_23] : memref<9x256xf32, #tpu.memory_space<vmem>>, vector<1x256xf32>
    tpu.vector_store %arg8[%c8, %c0_23], %38 {strides = array<i32>} : memref<9x256xf32, #tpu.memory_space<vmem>>, vector<1x256xf32>,
    return
  }
  func.func @transform_0(%arg0: i32) -> (i32, i32) {
    %c0_i32 = arith.constant 0 : i32
    %c0_i32_0 = arith.constant 0 : i32
    return %c0_i32, %arg0 : i32, i32
  }
  func.func @transform_1(%arg0: i32) -> (i32, i32) {
    %c0_i32 = arith.constant 0 : i32
    %c0_i32_0 = arith.constant 0 : i32
    %c0_i32_1 = arith.constant 0 : i32
    return %c0_i32, %c0_i32_0 : i32, i32
  }
  func.func @transform_2(%arg0: i32) -> (i32, i32) {
    %c0_i32 = arith.constant 0 : i32
    %c0_i32_0 = arith.constant 0 : i32
    %c0_i32_1 = arith.constant 0 : i32
    return %c0_i32, %c0_i32_0 : i32, i32
  }
  func.func @transform_3(%arg0: i32) -> (i32, i32) {
    %c0_i32 = arith.constant 0 : i32
    %c0_i32_0 = arith.constant 0 : i32
    %c0_i32_1 = arith.constant 0 : i32
    return %c0_i32, %c0_i32_0 : i32, i32
  }
  func.func @transform_4(%arg0: i32) -> (i32, i32) {
    %c0_i32 = arith.constant 0 : i32
    %c0_i32_0 = arith.constant 0 : i32
    %c0_i32_1 = arith.constant 0 : i32
    return %c0_i32, %c0_i32_0 : i32, i32
  }
  func.func @transform_5(%arg0: i32) -> (i32, i32) {
    %c0_i32 = arith.constant 0 : i32
    %c0_i32_0 = arith.constant 0 : i32
    %c0_i32_1 = arith.constant 0 : i32
    return %c0_i32, %c0_i32_0 : i32, i32
  }
  func.func @transform_6(%arg0: i32) -> (i32, i32) {
    %c0_i32 = arith.constant 0 : i32
    %c0_i32_0 = arith.constant 0 : i32
    %c0_i32_1 = arith.constant 0 : i32
    return %c0_i32, %c0_i32_0 : i32, i32
  }
  func.func @transform_7(%arg0: i32) -> (i32, i32) {
    %c0_i32 = arith.constant 0 : i32
    %c0_i32_0 = arith.constant 0 : i32
    return %c0_i32, %arg0 : i32, i32
  }
}

</mosaic_0001>

<llo_original>
// kernel: tpu_custom_call.1
$region0: #{tpu_custom_call.1}
  #allocation0 [shape = 'u32[]', space=smem, size = 0x4, offset = 0x4, fixed_abs, tag = 'smem constant byte address 0x4 - core index']
  #allocation1 [shape = 'u32[144,128]{1,0:T(1,128)}', space=vmem, size = 0x12000, scoped, tag = 'internal scratch']
  %s0 = inlined_call_operand.vmem [shape: f32[8,512], index: 0, kind: input, shape index: {}]
  %s1 = inlined_call_operand.vmem [shape: bf16[32,8], index: 1, kind: input, shape index: {}]
  %s2 = inlined_call_operand.vmem [shape: f32[32,1], index: 2, kind: input, shape index: {}]
  %s3 = inlined_call_operand.vmem [shape: bf16[32,32], index: 3, kind: input, shape index: {}]
  %s4 = inlined_call_operand.vmem [shape: f32[32,1], index: 4, kind: input, shape index: {}]
  %s5 = inlined_call_operand.vmem [shape: bf16[16,32], index: 5, kind: input, shape index: {}]
  %s6 = inlined_call_operand.vmem [shape: f32[16,1], index: 6, kind: input, shape index: {}]
  %s7 = inlined_call_operand.hbm [shape: f32[9,512], index: 7, kind: output, shape index: {}]
  %s8 = sld [smem:[#allocation0]]
  $region61: #{tpu_custom_call.1} parent=0
    _
  %s10 = ssub.s32 1, %s8
  %s11 = scalar_select 0, %s10, %s8
  $region1: #{tpu_custom_call.1} parent=0
    #allocation2 [shape = 'u8[32768]{0}', space=vmem, size = 0x8000, scoped, tag = 'output window, operand 0']
    #allocation3 [shape = 's32[2]{0}', space=sflag, size = 0x8, scoped, tag = 'scoped memory for tpu_custom_call.1']
    %12 = vsyncpa [#allocation3], 0
    %s13 = scalar_lea.sflag [#allocation3], 1
    %14 = vsyncpa %s13, 0
    loop: start=0, step=1, limit=4
    $region2: #{tpu_custom_call.1} parent=1 // loop_pre_header
      _
    $region3: #{tpu_custom_call.1} parent=1 // loop_header
      %s16 = sphi 0, %s20
      %p17 = scmp.ge.s32.totalorder %s16, 4
      %s26 = sphi 0, %s28
      %s29 = sphi 0, %s26
      %s30 = sphi 0, %s29
      %s46 = sphi 0, %s30
      %s50 = sphi 0, %s50
      %s52 = sphi 0, %s50
      %s53 = sphi 0, %s52
      %s67 = sphi 0, %s53
      %s71 = sphi 0, %s71
      %s73 = sphi 0, %s71
      %s74 = sphi 0, %s73
      %s88 = sphi 0, %s74
      %s92 = sphi 0, %s92
      %s94 = sphi 0, %s92
      %s95 = sphi 0, %s94
      %s109 = sphi 0, %s95
      %s113 = sphi 0, %s113
      %s115 = sphi 0, %s113
      %s116 = sphi 0, %s115
      %s130 = sphi 0, %s116
      %s134 = sphi 0, %s134
      %s136 = sphi 0, %s134
      %s137 = sphi 0, %s136
      %s151 = sphi 0, %s137
      %s155 = sphi 0, %s155
      %s157 = sphi 0, %s155
      %s158 = sphi 0, %s157
      %s172 = sphi 0, %s158
      %s178 = sphi 0, %s180
      %s181 = sphi 0, %s178
      %s182 = sphi 0, %s181
      %s198 = sphi 0, %s182
    $region4: #{tpu_custom_call.1} parent=1 // loop_header_branch
      %19 = sbr.rel (%p17) target = $region8
    $region5: #{tpu_custom_call.1} parent=1 // loop_body
      %s21 = ssub.s32 %s16, 1
      %s22 = ssub.s32 %s16, 2
      %s23 = sadd.s32 %s16, 1
      %s24 = ssub.s32 %s16, %s23
      %p25 = scmp.eq.s32.totalorder %s24, 0
      %s27 = sadd.s32 %s26, 1
      %s28 = scalar_select %p25, %s26, %s27
      %p31 = pneg %p25
      %p32 = scmp.eq.s32.totalorder %s16, 1
      %p33 = por %p31, %p32
      %p34 = scmp.ne.s32.totalorder %s26, %s29
      %p35 = scmp.eq.s32.totalorder %s16, 0
      %p36 = por %p34, %p35
      %p37 = scmp.ne.s32.totalorder %s26, %s29
      %p38 = scmp.eq.s32.totalorder %s21, 1
      %p39 = por %p37, %p38
      %p40 = scmp.ne.s32.totalorder %s29, %s30
      %p41 = scmp.eq.s32.totalorder %s21, 0
      %p42 = por %p40, %p41
      %p43 = scmp.ne.s32.totalorder %s29, %s30
      %p44 = scmp.eq.s32.totalorder %s22, 1
      %p45 = por %p43, %p44
      %p47 = scmp.ne.s32.totalorder %s30, %s46
      %p48 = scmp.eq.s32.totalorder %s22, 0
      %p49 = por %p47, %p48
      %s51 = sadd.s32 %s50, 1
      %p54 = scmp.eq.s32.totalorder %s16, 1
      %p55 = scmp.ne.s32.totalorder %s50, %s52
      %p56 = scmp.eq.s32.totalorder %s16, 0
      %p57 = por %p55, %p56
      %p58 = scmp.ne.s32.totalorder %s50, %s52
      %p59 = scmp.eq.s32.totalorder %s21, 1
      %p60 = por %p58, %p59
      %p61 = scmp.ne.s32.totalorder %s52, %s53
      %p62 = scmp.eq.s32.totalorder %s21, 0
      %p63 = por %p61, %p62
      %p64 = scmp.ne.s32.totalorder %s52, %s53
      %p65 = scmp.eq.s32.totalorder %s22, 1
      %p66 = por %p64, %p65
      %p68 = scmp.ne.s32.totalorder %s53, %s67
      %p69 = scmp.eq.s32.totalorder %s22, 0
      %p70 = por %p68, %p69
      %s72 = sadd.s32 %s71, 1
      %p75 = scmp.eq.s32.totalorder %s16, 1
      %p76 = scmp.ne.s32.totalorder %s71, %s73
      %p77 = scmp.eq.s32.totalorder %s16, 0
      %p78 = por %p76, %p77
      %p79 = scmp.ne.s32.totalorder %s71, %s73
      %p80 = scmp.eq.s32.totalorder %s21, 1
      %p81 = por %p79, %p80
      %p82 = scmp.ne.s32.totalorder %s73, %s74
      %p83 = scmp.eq.s32.totalorder %s21, 0
      %p84 = por %p82, %p83
      %p85 = scmp.ne.s32.totalorder %s73, %s74
      %p86 = scmp.eq.s32.totalorder %s22, 1
      %p87 = por %p85, %p86
      %p89 = scmp.ne.s32.totalorder %s74, %s88
      %p90 = scmp.eq.s32.totalorder %s22, 0
      %p91 = por %p89, %p90
      %s93 = sadd.s32 %s92, 1
      %p96 = scmp.eq.s32.totalorder %s16, 1
      %p97 = scmp.ne.s32.totalorder %s92, %s94
      %p98 = scmp.eq.s32.totalorder %s16, 0
      %p99 = por %p97, %p98
      %p100 = scmp.ne.s32.totalorder %s92, %s94
      %p101 = scmp.eq.s32.totalorder %s21, 1
      %p102 = por %p100, %p101
      %p103 = scmp.ne.s32.totalorder %s94, %s95
      %p104 = scmp.eq.s32.totalorder %s21, 0
      %p105 = por %p103, %p104
      %p106 = scmp.ne.s32.totalorder %s94, %s95
      %p107 = scmp.eq.s32.totalorder %s22, 1
      %p108 = por %p106, %p107
      %p110 = scmp.ne.s32.totalorder %s95, %s109
      %p111 = scmp.eq.s32.totalorder %s22, 0
      %p112 = por %p110, %p111
      %s114 = sadd.s32 %s113, 1
      %p117 = scmp.eq.s32.totalorder %s16, 1
      %p118 = scmp.ne.s32.totalorder %s113, %s115
      %p119 = scmp.eq.s32.totalorder %s16, 0
      %p120 = por %p118, %p119
      %p121 = scmp.ne.s32.totalorder %s113, %s115
      %p122 = scmp.eq.s32.totalorder %s21, 1
      %p123 = por %p121, %p122
      %p124 = scmp.ne.s32.totalorder %s115, %s116
      %p125 = scmp.eq.s32.totalorder %s21, 0
      %p126 = por %p124, %p125
      %p127 = scmp.ne.s32.totalorder %s115, %s116
      %p128 = scmp.eq.s32.totalorder %s22, 1
      %p129 = por %p127, %p128
      %p131 = scmp.ne.s32.totalorder %s116, %s130
      %p132 = scmp.eq.s32.totalorder %s22, 0
      %p133 = por %p131, %p132
      %s135 = sadd.s32 %s134, 1
      %p138 = scmp.eq.s32.totalorder %s16, 1
      %p139 = scmp.ne.s32.totalorder %s134, %s136
      %p140 = scmp.eq.s32.totalorder %s16, 0
      %p141 = por %p139, %p140
      %p142 = scmp.ne.s32.totalorder %s134, %s136
      %p143 = scmp.eq.s32.totalorder %s21, 1
      %p144 = por %p142, %p143
      %p145 = scmp.ne.s32.totalorder %s136, %s137
      %p146 = scmp.eq.s32.totalorder %s21, 0
      %p147 = por %p145, %p146
      %p148 = scmp.ne.s32.totalorder %s136, %s137
      %p149 = scmp.eq.s32.totalorder %s22, 1
      %p150 = por %p148, %p149
      %p152 = scmp.ne.s32.totalorder %s137, %s151
      %p153 = scmp.eq.s32.totalorder %s22, 0
      %p154 = por %p152, %p153
      %s156 = sadd.s32 %s155, 1
      %p159 = scmp.eq.s32.totalorder %s16, 1
      %p160 = scmp.ne.s32.totalorder %s155, %s157
      %p161 = scmp.eq.s32.totalorder %s16, 0
      %p162 = por %p160, %p161
      %p163 = scmp.ne.s32.totalorder %s155, %s157
      %p164 = scmp.eq.s32.totalorder %s21, 1
      %p165 = por %p163, %p164
      %p166 = scmp.ne.s32.totalorder %s157, %s158
      %p167 = scmp.eq.s32.totalorder %s21, 0
      %p168 = por %p166, %p167
      %p169 = scmp.ne.s32.totalorder %s157, %s158
      %p170 = scmp.eq.s32.totalorder %s22, 1
      %p171 = por %p169, %p170
      %p173 = scmp.ne.s32.totalorder %s158, %s172
      %p174 = scmp.eq.s32.totalorder %s22, 0
      %p175 = por %p173, %p174
      %s176 = ssub.s32 %s16, %s23
      %p177 = scmp.eq.s32.totalorder %s176, 0
      %s179 = sadd.s32 %s178, 1
      %s180 = scalar_select %p177, %s178, %s179
      %p183 = pneg %p177
      %p184 = scmp.eq.s32.totalorder %s16, 1
      %p185 = por %p183, %p184
      %p186 = scmp.ne.s32.totalorder %s178, %s181
      %p187 = scmp.eq.s32.totalorder %s16, 0
      %p188 = por %p186, %p187
      %p189 = scmp.ne.s32.totalorder %s178, %s181
      %p190 = scmp.eq.s32.totalorder %s21, 1
      %p191 = por %p189, %p190
      %p192 = scmp.ne.s32.totalorder %s181, %s182
      %p193 = scmp.eq.s32.totalorder %s21, 0
      %p194 = por %p192, %p193
      %p195 = scmp.ne.s32.totalorder %s181, %s182
      %p196 = scmp.eq.s32.totalorder %s22, 1
      %p197 = por %p195, %p196
      %p199 = scmp.ne.s32.totalorder %s182, %s198
      %p200 = scmp.eq.s32.totalorder %s22, 0
      %p201 = por %p199, %p200
      %p202 = scmp.le.s32.totalorder 1, %s16
      %p203 = scmp.lt.s32.totalorder %s16, 3
      %p204 = pnand %p202, %p203
      %p205 = pneg %p204
      // Predicated region
      $region9: #{tpu_custom_call.1} parent=5 // pred_check
        _
      $region10: #{tpu_custom_call.1} parent=5 // pred_check_branch
        %207 = sbr.rel (%p204) target = $region12
      $region11: #{tpu_custom_call.1} parent=5 // pred_region
        %s208 = ssub.s32 %s16, 1
        // Predicated region
        $region13: #{tpu_custom_call.1} parent=11 // pred_check
          %p209 = pneg %p63
        $region14: #{tpu_custom_call.1} parent=11 // pred_check_branch
          %211 = sbr.rel (%p209) target = $region16
        $region15: #{tpu_custom_call.1} parent=11 // pred_region
          _
        $region16: #{tpu_custom_call.1} parent=11 // pred_fallthru
          _
        // Predicated region
        $region17: #{tpu_custom_call.1} parent=11 // pred_check
          %p212 = pneg %p84
        $region18: #{tpu_custom_call.1} parent=11 // pred_check_branch
          %214 = sbr.rel (%p212) target = $region20
        $region19: #{tpu_custom_call.1} parent=11 // pred_region
          _
        $region20: #{tpu_custom_call.1} parent=11 // pred_fallthru
          _
        // Predicated region
        $region21: #{tpu_custom_call.1} parent=11 // pred_check
          %p215 = pneg %p105
        $region22: #{tpu_custom_call.1} parent=11 // pred_check_branch
          %217 = sbr.rel (%p215) target = $region24
        $region23: #{tpu_custom_call.1} parent=11 // pred_region
          _
        $region24: #{tpu_custom_call.1} parent=11 // pred_fallthru
          _
        // Predicated region
        $region25: #{tpu_custom_call.1} parent=11 // pred_check
          %p218 = pneg %p126
        $region26: #{tpu_custom_call.1} parent=11 // pred_check_branch
          %220 = sbr.rel (%p218) target = $region28
        $region27: #{tpu_custom_call.1} parent=11 // pred_region
          _
        $region28: #{tpu_custom_call.1} parent=11 // pred_fallthru
          _
        // Predicated region
        $region29: #{tpu_custom_call.1} parent=11 // pred_check
          %p221 = pneg %p147
        $region30: #{tpu_custom_call.1} parent=11 // pred_check_branch
          %223 = sbr.rel (%p221) target = $region32
        $region31: #{tpu_custom_call.1} parent=11 // pred_region
          _
        $region32: #{tpu_custom_call.1} parent=11 // pred_fallthru
          _
        // Predicated region
        $region33: #{tpu_custom_call.1} parent=11 // pred_check
          %p224 = pneg %p168
        $region34: #{tpu_custom_call.1} parent=11 // pred_check_branch
          %226 = sbr.rel (%p224) target = $region36
        $region35: #{tpu_custom_call.1} parent=11 // pred_region
          _
        $region36: #{tpu_custom_call.1} parent=11 // pred_fallthru
          _
      $region12: #{tpu_custom_call.1} parent=5 // pred_fallthru
        _
      %p227 = scmp.lt.s32.totalorder %s16, 2
      // Predicated region
      $region37: #{tpu_custom_call.1} parent=5 // pred_check
        %p228 = pneg %p227
      $region38: #{tpu_custom_call.1} parent=5 // pred_check_branch
        %230 = sbr.rel (%p228) target = $region40
      $region39: #{tpu_custom_call.1} parent=5 // pred_region
        // Predicated region
        $region41: #{tpu_custom_call.1} parent=39 // pred_check
          %p231 = pneg %p36
        $region42: #{tpu_custom_call.1} parent=39 // pred_check_branch
          %233 = sbr.rel (%p231) target = $region44
        $region43: #{tpu_custom_call.1} parent=39 // pred_region
          %s234 = smul.u32 2, %s16
          %p235 = scmp.lt.s32.totalorder %s234, 3
          %s236 = scalar_select %p235, %s234, 3
          %s237 = smul.addr %s236, 8
          %s238 = scalar_lea.vmem %s0, %s237
          %s239 = smul.u32 2, %s16
        $region44: #{tpu_custom_call.1} parent=39 // pred_fallthru
          _
      $region40: #{tpu_custom_call.1} parent=5 // pred_fallthru
        _
      %p240 = scmp.le.s32.totalorder 1, %s16
      %p241 = scmp.lt.s32.totalorder %s16, 3
      %p242 = pnand %p240, %p241
      %p243 = pneg %p242
      // Predicated region
      $region45: #{tpu_custom_call.1} parent=5 // pred_check
        _
      $region46: #{tpu_custom_call.1} parent=5 // pred_check_branch
        %245 = sbr.rel (%p242) target = $region48
      $region47: #{tpu_custom_call.1} parent=5 // pred_region
        %s246 = ssub.s32 %s16, 1
        %s247 = smul.u32 2, %s21
        %p248 = scmp.lt.s32.totalorder %s247, 3
        %s249 = scalar_select %p248, %s247, 3
        %s250 = smul.addr %s249, 8
        %s251 = scalar_lea.vmem %s0, %s250
        %p252 = pneg %p42
        %p253 = pneg %p39
        %p254 = pneg %p63
        %p255 = pneg %p60
        %p256 = pneg %p84
        %p257 = pneg %p81
        %p258 = pneg %p105
        %p259 = pneg %p102
        %p260 = pneg %p126
        %p261 = pneg %p123
        %p262 = pneg %p147
        %p263 = pneg %p144
        %p264 = pneg %p168
        %p265 = pneg %p165
        %p266 = pneg %p194
        %p267 = pneg %p191
        %s268 = sand.u32 %s181, 1
        %s269 = scalar_lea.sflag [#allocation3], %s268
        %s270 = sand.u32 %s181, 1
        %s271 = smul.addr %s270, 32
        %s272 = scalar_lea.vmem [#allocation2], %s271
        %s273 = smul.u32 2, %s21
        %p274 = scmp.lt.s32.totalorder %s273, 3
        %s275 = scalar_select %p274, %s273, 3
        %s276 = smul.addr %s275, 8
        %s277 = scalar_lea.vmem %s0, %s276
        %s278 = smul.u32 2, %s21
        %s279 = smul.u32 2, %s21
        %v281 = vld [vmem:[%s277] sm:$0xff]
        %v282 = vld [vmem:[%s277 + $0x8] sm:$0xff]
        %v283 = vpack.c.bf16 %v281, %v281
        %v284 = vpack.c.bf16 %v282, %v282
        %v285 = vld [vmem:[%s1] sm:$0xf]
        %v286 = vld [vmem:[%s1 + $0x4] sm:$0xf]
        %v287 = vld [vmem:[%s1 + $0x8] sm:$0xf]
        %v288 = vld [vmem:[%s1 + $0xc] sm:$0xf]
        %v289 = vld [vmem:[%s2] sm:$0xff]
        %v290 = vld [vmem:[%s2 + $0x8] sm:$0xff]
        %v291 = vld [vmem:[%s2 + $0x10] sm:$0xff]
        %v292 = vld [vmem:[%s2 + $0x18] sm:$0xff]
        %294 = vset.pattern.permute.xlu0 0
        %295 = vperm.xlu0 %294, %v289
        %v296 = vpop.permute.xlu0 %295
        %299 = vset.pattern.permute.xlu0 0
        %300 = vperm.xlu0 %299, %v290
        %v301 = vpop.permute.xlu0 %300
        %304 = vset.pattern.permute.xlu0 0
        %305 = vperm.xlu0 %304, %v291
        %v306 = vpop.permute.xlu0 %305
        %309 = vset.pattern.permute.xlu0 0
        %310 = vperm.xlu0 %309, %v292
        %v311 = vpop.permute.xlu0 %310
        %v317 = vunpack.c.l.b16 %v285
        %v318 = vunpack.c.l.b16 %v286
        %v319 = vunpack.c.l.b16 %v287
        %v320 = vunpack.c.l.b16 %v288
        %v321 = vpack.c.b16 %v318, %v317
        %v322 = vpack.c.b16 %v320, %v319
        %vm323 = vcmask 64512
        %v325 = vsel %vm323, %v321, 0
        %v328 = vsel %vm323, %v322, 0
        %vm330 = vcmask 1043456
        %v332 = vsel %vm330, %v283, 0
        %v335 = vsel %vm330, %v284, 0
        %337 = vmatprep.subr.bf16.mxu0 0
        %338 = vmatpush1.bf16.msra.mxu0 0
        %339 = vmatprep.subr.bf16.mxu0 0
        %340 = vmatpush1.bf16.msra.mxu0 0
        %341 = vmatprep.subr.bf16.mxu0 0
        %342 = vmatpush1.bf16.msra.mxu0 0
        %343 = vmatprep.subr.bf16.mxu0 0
        %344 = vmatpush1.bf16.msra.mxu0 0
        %345 = vmatprep.subr.bf16.mxu0 0
        %346 = vmatpush1.bf16.msra.mxu0 0
        %347 = vmatprep.subr.bf16.mxu0 0
        %348 = vmatpush1.bf16.msra.mxu0 0
        %349 = vmatprep.subr.bf16.mxu0 0
        %350 = vmatpush1.bf16.msra.mxu0 0
        %351 = vmatprep.subr.bf16.mxu0 %v335
        %352 = vmatpush1.bf16.msra.mxu0 %v332
        %353 = vmatprep.subr.bf16.mxu0 0
        %354 = vmatpush2.bf16.msra.mxu0 0
        %355 = vmatprep.subr.bf16.mxu0 0
        %356 = vmatpush2.bf16.msra.mxu0 0
        %357 = vmatprep.subr.bf16.mxu0 0
        %358 = vmatpush2.bf16.msra.mxu0 0
        %359 = vmatprep.subr.bf16.mxu0 0
        %360 = vmatpush2.bf16.msra.mxu0 0
        %361 = vmatprep.subr.bf16.mxu0 0
        %362 = vmatpush2.bf16.msra.mxu0 0
        %363 = vmatprep.subr.bf16.mxu0 0
        %364 = vmatpush2.bf16.msra.mxu0 0
        %365 = vmatprep.subr.bf16.mxu0 0
        %366 = vmatpush2.bf16.msra.mxu0 0
        %367 = vmatprep.subr.bf16.mxu0 0
        %368 = vmatpush2.bf16.msra.mxu0 0
        %369 = vmatprep.mubr.bf16.mxu0 0
        %370 = vmatmul.mubr.bf16.gmra.mxu0 %v325
        %v371 = vpop.f32.mrf.mxu0
        %v372 = vadd.f32 %v296, %v371
        %v373 = vpop.f32.mrf.mxu0
        %v374 = vadd.f32 %v296, %v373
        %v375 = vpop.f32.mrf.mxu0
        %v376 = vadd.f32 %v301, %v375
        %v377 = vpop.f32.mrf.mxu0
        %v378 = vadd.f32 %v301, %v377
        %379 = vmatprep.mubr.bf16.mxu0 0
        %380 = vmatmul.mubr.bf16.gmra.mxu0 %v328
        %v381 = vpop.f32.mrf.mxu0
        %v382 = vadd.f32 %v306, %v381
        %v383 = vpop.f32.mrf.mxu0
        %v384 = vadd.f32 %v306, %v383
        %v385 = vpop.f32.mrf.mxu0
        %v386 = vadd.f32 %v311, %v385
        %v387 = vpop.f32.mrf.mxu0
        %v388 = vadd.f32 %v311, %v387
        %389 = vdwg.mxu0
        %v390 = vmax.f32 %v372, 0.0
        %v391 = vmax.f32 %v374, 0.0
        %v392 = vmax.f32 %v376, 0.0
        %v393 = vmax.f32 %v378, 0.0
        %v394 = vmax.f32 %v382, 0.0
        %v395 = vmax.f32 %v384, 0.0
        %v396 = vmax.f32 %v386, 0.0
        %v397 = vmax.f32 %v388, 0.0
        %v398 = vpack.c.bf16 %v392, %v390
        %v399 = vpack.c.bf16 %v393, %v391
        %v400 = vpack.c.bf16 %v396, %v394
        %v401 = vpack.c.bf16 %v397, %v395
        %v402 = vld [vmem:[%s3] sm:$0xf]
        %v403 = vld [vmem:[%s3 + $0x4] sm:$0xf]
        %v404 = vld [vmem:[%s3 + $0x8] sm:$0xf]
        %v405 = vld [vmem:[%s3 + $0xc] sm:$0xf]
        %v406 = vld [vmem:[%s4] sm:$0xff]
        %v407 = vld [vmem:[%s4 + $0x8] sm:$0xff]
        %v408 = vld [vmem:[%s4 + $0x10] sm:$0xff]
        %v409 = vld [vmem:[%s4 + $0x18] sm:$0xff]
        %411 = vset.pattern.permute.xlu0 0
        %412 = vperm.xlu0 %411, %v406
        %v413 = vpop.permute.xlu0 %412
        %416 = vset.pattern.permute.xlu0 0
        %417 = vperm.xlu0 %416, %v407
        %v418 = vpop.permute.xlu0 %417
        %421 = vset.pattern.permute.xlu0 0
        %422 = vperm.xlu0 %421, %v408
        %v423 = vpop.permute.xlu0 %422
        %426 = vset.pattern.permute.xlu0 0
        %427 = vperm.xlu0 %426, %v409
        %v428 = vpop.permute.xlu0 %427
        %v434 = vunpack.c.l.b16 %v402
        %v435 = vunpack.c.l.b16 %v403
        %v436 = vunpack.c.l.b16 %v404
        %v437 = vunpack.c.l.b16 %v405
        %v438 = vpack.c.b16 %v435, %v434
        %v439 = vpack.c.b16 %v437, %v436
        %vm440 = vcmask 261120
        %v442 = vsel %vm440, %v438, 0
        %v445 = vsel %vm440, %v439, 0
        %447 = vmatprep.subr.bf16.mxu0 0
        %448 = vmatpush1.bf16.msra.mxu0 0
        %449 = vmatprep.subr.bf16.mxu0 0
        %450 = vmatpush1.bf16.msra.mxu0 0
        %451 = vmatprep.subr.bf16.mxu0 0
        %452 = vmatpush1.bf16.msra.mxu0 0
        %453 = vmatprep.subr.bf16.mxu0 0
        %454 = vmatpush1.bf16.msra.mxu0 0
        %455 = vmatprep.subr.bf16.mxu0 0
        %456 = vmatpush1.bf16.msra.mxu0 0
        %457 = vmatprep.subr.bf16.mxu0 0
        %458 = vmatpush1.bf16.msra.mxu0 0
        %459 = vmatprep.subr.bf16.mxu0 %v401
        %460 = vmatpush1.bf16.msra.mxu0 %v400
        %461 = vmatprep.subr.bf16.mxu0 %v399
        %462 = vmatpush1.bf16.msra.mxu0 %v398
        %463 = vmatprep.subr.bf16.mxu0 0
        %464 = vmatpush2.bf16.msra.mxu0 0
        %465 = vmatprep.subr.bf16.mxu0 0
        %466 = vmatpush2.bf16.msra.mxu0 0
        %467 = vmatprep.subr.bf16.mxu0 0
        %468 = vmatpush2.bf16.msra.mxu0 0
        %469 = vmatprep.subr.bf16.mxu0 0
        %470 = vmatpush2.bf16.msra.mxu0 0
        %471 = vmatprep.subr.bf16.mxu0 0
        %472 = vmatpush2.bf16.msra.mxu0 0
        %473 = vmatprep.subr.bf16.mxu0 0
        %474 = vmatpush2.bf16.msra.mxu0 0
        %475 = vmatprep.subr.bf16.mxu0 0
        %476 = vmatpush2.bf16.msra.mxu0 0
        %477 = vmatprep.subr.bf16.mxu0 0
        %478 = vmatpush2.bf16.msra.mxu0 0
        %479 = vmatprep.mubr.bf16.mxu0 0
        %480 = vmatmul.mubr.bf16.gmra.mxu0 %v442
        %v481 = vpop.f32.mrf.mxu0
        %v482 = vadd.f32 %v413, %v481
        %v483 = vpop.f32.mrf.mxu0
        %v484 = vadd.f32 %v413, %v483
        %v485 = vpop.f32.mrf.mxu0
        %v486 = vadd.f32 %v418, %v485
        %v487 = vpop.f32.mrf.mxu0
        %v488 = vadd.f32 %v418, %v487
        %489 = vmatprep.mubr.bf16.mxu0 0
        %490 = vmatmul.mubr.bf16.gmra.mxu0 %v445
        %v491 = vpop.f32.mrf.mxu0
        %v492 = vadd.f32 %v423, %v491
        %v493 = vpop.f32.mrf.mxu0
        %v494 = vadd.f32 %v423, %v493
        %v495 = vpop.f32.mrf.mxu0
        %v496 = vadd.f32 %v428, %v495
        %v497 = vpop.f32.mrf.mxu0
        %v498 = vadd.f32 %v428, %v497
        %499 = vdwg.mxu0
        %v500 = vmax.f32 %v482, 0.0
        %v501 = vmax.f32 %v484, 0.0
        %v502 = vmax.f32 %v486, 0.0
        %v503 = vmax.f32 %v488, 0.0
        %v504 = vmax.f32 %v492, 0.0
        %v505 = vmax.f32 %v494, 0.0
        %v506 = vmax.f32 %v496, 0.0
        %v507 = vmax.f32 %v498, 0.0
        %v508 = vpack.c.bf16 %v502, %v500
        %v509 = vpack.c.bf16 %v503, %v501
        %v510 = vpack.c.bf16 %v506, %v504
        %v511 = vpack.c.bf16 %v507, %v505
        %v512 = vld [vmem:[%s5] sm:$0xf]
        %v513 = vld [vmem:[%s5 + $0x4] sm:$0xf]
        %v514 = vld [vmem:[%s6] sm:$0xff]
        %v515 = vld [vmem:[%s6 + $0x8] sm:$0xff]
        %517 = vset.pattern.permute.xlu0 0
        %518 = vperm.xlu0 %517, %v514
        %v519 = vpop.permute.xlu0 %518
        %522 = vset.pattern.permute.xlu0 0
        %523 = vperm.xlu0 %522, %v515
        %v524 = vpop.permute.xlu0 %523
        %v528 = vunpack.c.l.b16 %v512
        %v529 = vunpack.c.l.b16 %v513
        %v530 = vpack.c.b16 %v529, %v528
        %v532 = vsel %vm440, %v530, 0
        %534 = vmatprep.subr.bf16.mxu0 0
        %535 = vmatpush1.bf16.msra.mxu0 0
        %536 = vmatprep.subr.bf16.mxu0 0
        %537 = vmatpush1.bf16.msra.mxu0 0
        %538 = vmatprep.subr.bf16.mxu0 0
        %539 = vmatpush1.bf16.msra.mxu0 0
        %540 = vmatprep.subr.bf16.mxu0 0
        %541 = vmatpush1.bf16.msra.mxu0 0
        %542 = vmatprep.subr.bf16.mxu0 0
        %543 = vmatpush1.bf16.msra.mxu0 0
        %544 = vmatprep.subr.bf16.mxu0 0
        %545 = vmatpush1.bf16.msra.mxu0 0
        %546 = vmatprep.subr.bf16.mxu0 %v511
        %547 = vmatpush1.bf16.msra.mxu0 %v510
        %548 = vmatprep.subr.bf16.mxu0 %v509
        %549 = vmatpush1.bf16.msra.mxu0 %v508
        %550 = vmatprep.subr.bf16.mxu0 0
        %551 = vmatpush2.bf16.msra.mxu0 0
        %552 = vmatprep.subr.bf16.mxu0 0
        %553 = vmatpush2.bf16.msra.mxu0 0
        %554 = vmatprep.subr.bf16.mxu0 0
        %555 = vmatpush2.bf16.msra.mxu0 0
        %556 = vmatprep.subr.bf16.mxu0 0
        %557 = vmatpush2.bf16.msra.mxu0 0
        %558 = vmatprep.subr.bf16.mxu0 0
        %559 = vmatpush2.bf16.msra.mxu0 0
        %560 = vmatprep.subr.bf16.mxu0 0
        %561 = vmatpush2.bf16.msra.mxu0 0
        %562 = vmatprep.subr.bf16.mxu0 0
        %563 = vmatpush2.bf16.msra.mxu0 0
        %564 = vmatprep.subr.bf16.mxu0 0
        %565 = vmatpush2.bf16.msra.mxu0 0
        %566 = vmatprep.mubr.bf16.mxu0 0
        %567 = vmatmul.mubr.bf16.gmra.mxu0 %v532
        %v568 = vpop.f32.mrf.mxu0
        %v569 = vadd.f32 %v519, %v568
        %v570 = vpop.f32.mrf.mxu0
        %v571 = vadd.f32 %v519, %v570
        %v572 = vpop.f32.mrf.mxu0
        %v573 = vadd.f32 %v524, %v572
        %v574 = vpop.f32.mrf.mxu0
        %v575 = vadd.f32 %v524, %v574
        %576 = vdwg.mxu0
        %v577 = vmul.f32 %v573, 0.5
        %v578 = vmul.f32 %v575, 0.5
        %v579 = vmul.f32 %v577, 1.442695
        %v580 = vpow.pop %v579
        %v581 = vmul.f32 %v578, 1.442695
        %v582 = vpow.pop %v581
        %v583 = vsub.f32 %v281, %v569
        %v584 = vsub.f32 %v282, %v571
        %v585 = vmul.f32 %v580, %v583
        %v586 = vmul.f32 %v582, %v584
        %587 = vst [vmem:[%s272] sm:$0xff] %v585
        %588 = vst [vmem:[%s272 + $0x8] sm:$0xff] %v586
        %v589 = vmul.f32 %v585, %v585
        %v590 = vmul.f32 %v586, %v586
        %v591 = vsub.f32 %v589, %v573
        %v592 = vsub.f32 %v590, %v575
        %v593 = vrot.slane %v591, 4
        %v594 = vadd.f32 %v591, %v593
        %v595 = vrot.slane %v594, 2
        %v596 = vadd.f32 %v594, %v595
        %v597 = vrot.slane %v596, 1
        %v598 = vadd.f32 %v596, %v597
        %v599 = vrot.slane %v592, 4
        %v600 = vadd.f32 %v592, %v599
        %v601 = vrot.slane %v600, 2
        %v602 = vadd.f32 %v600, %v601
        %v603 = vrot.slane %v602, 1
        %v604 = vadd.f32 %v602, %v603
        %v605 = vadd.f32 %v598, 14.703016
        %v606 = vadd.f32 %v604, 14.703016
        %v607 = vmul.f32 %v605, -0.5
        %v608 = vmul.f32 %v606, -0.5
        %v611 = vcombine.low %v607, %v608
        %v613 = vunpack.c.l.s4 1966171168
        %v614 = vunpack.c.0.s8 %v613
        %v615 = vlaneseq
        %v616 = vshrl.u32 %v615, 7
        %v617 = vsub.s32 %v614, %v616
        %v618 = vrot.slane %v611, %v617
        %v620 = vunpack.c.l.s4 1966171168
        %v621 = vunpack.c.0.s8 %v620
        %v622 = vlaneseq
        %v623 = vshrl.u32 %v622, 7
        %v624 = vsub.s32 %v621, %v623
        %v625 = vrot.slane %v618, %v624
        %v627 = vlaneseq
        %vm628 = vcmp.ge.s32.totalorder %v627, 0
        %vm629 = vcmp.lt.s32.totalorder %v627, 256
        %vm630 = vmand %vm628, %vm629
        %s631 = scalar_lea.vmem %s272, 16 [#allocation2]
        %632 = vst.msk [vmem:[%s631] ss:$8 sm:$0x3] %vm630, %v625
        %633 = vst.msk [vmem:[%s631] ss:$8 sm:$0x0] %vm630, %v625
        %s634 = sand.u32 %s181, 1
        %s635 = scalar_lea.sflag [#allocation3], %s634
        %s636 = sand.u32 %s181, 1
        %s637 = smul.addr %s636, 32
        %s638 = scalar_lea.vmem [#allocation2], %s637
        // Predicated region
        $region49: #{tpu_custom_call.1} parent=47 // pred_check
          %p639 = pneg %p191
        $region50: #{tpu_custom_call.1} parent=47 // pred_check_branch
          %641 = sbr.rel (%p639) target = $region52
        $region51: #{tpu_custom_call.1} parent=47 // pred_region
          %s642 = smul.u32 2, %s21
          %s644 = ssub.s32 512, 512
          %645 = vsyncadd %s635, %s644
          %s646 = smul.addr %s642, 128
          %s647 = scalar_lea.hbm %s7, %s646
          %s648 = sshll.u32 %s638, 4
          %s649 = int_to_ptr.vmem [resolvable:$true] %s648
          %654 = dma.vmem_to_hbm [thread:$0]  %s649, 512, %s647, %s635, 256, 512, 16
        $region52: #{tpu_custom_call.1} parent=47 // pred_fallthru
          _
      $region48: #{tpu_custom_call.1} parent=5 // pred_fallthru
        _
      %p655 = scmp.le.s32.totalorder 2, %s16
      // Predicated region
      $region53: #{tpu_custom_call.1} parent=5 // pred_check
        %p656 = pneg %p655
      $region54: #{tpu_custom_call.1} parent=5 // pred_check_branch
        %658 = sbr.rel (%p656) target = $region56
      $region55: #{tpu_custom_call.1} parent=5 // pred_region
        %s659 = ssub.s32 %s16, 2
        // Predicated region
        $region57: #{tpu_custom_call.1} parent=55 // pred_check
          %p660 = pneg %p197
        $region58: #{tpu_custom_call.1} parent=55 // pred_check_branch
          %662 = sbr.rel (%p660) target = $region60
        $region59: #{tpu_custom_call.1} parent=55 // pred_region
          %s663 = sand.u32 %s182, 1
          %s664 = scalar_lea.sflag [#allocation3], %s663
          %s665 = sand.u32 %s182, 1
          %s666 = smul.addr %s665, 32
          %s667 = scalar_lea.vmem [#allocation2], %s666
          %668 = dma.done %s664, 512
        $region60: #{tpu_custom_call.1} parent=55 // pred_fallthru
          _
      $region56: #{tpu_custom_call.1} parent=5 // pred_fallthru
        _
    $region6: #{tpu_custom_call.1} parent=1 // loop_footer
      %s20 = sadd.s32 1, %s16
    $region7: #{tpu_custom_call.1} parent=1 // loop_footer_branch
      %15 = sbr.rel target = $region3
    $region8: #{tpu_custom_call.1} parent=1 // loop_exit
      _
    %669 = vsyncpa [#allocation3], 1
    %s670 = scalar_lea.sflag [#allocation3], 1
    %671 = vsyncpa %s670, 1

</llo_original>
